<compile_context>
chip_gen: v7x
topology: tpu7x:2x2x1
jax: 0.10.0
libtpu: 0.0.40
codegen_flags: <defaults>
</compile_context>

<pallas_src>
import jax
import jax.numpy as jnp
from jax.experimental import pallas as pl
from jax.experimental.pallas import tpu as pltpu


def _round_up(x: int, m: int) -> int:
    return ((x + m - 1) // m) * m


def cross_layer_kernel(x0_ref, x_ref, wt_ref, b_ref, o_ref):
    x = x_ref[...]
    # Linear(x) = x @ W.T ; W.T was materialized once in the wrapper so this
    # is the canonical MXU contraction (no in-kernel weight transpose).
    lin = jnp.dot(x, wt_ref[...], preferred_element_type=jnp.float32)
    lin = lin + b_ref[...].astype(jnp.float32)
    out = x0_ref[...].astype(jnp.float32) * lin + x.astype(jnp.float32)
    o_ref[...] = out.astype(o_ref.dtype)


def cross_layer(x0, x, w, b, *, block_m: int = 1024):
    """x0, x: (B, d); w: (d, d) PyTorch Linear weight; b: (d,)."""
    B, d = x.shape
    itemsize = jnp.dtype(x.dtype).itemsize
    sublane = max(8, 32 // itemsize)          # 8 rows for f32, 16 for bf16

    # Pre-transpose W once (tiny d x d pass) and reshape bias to 2-D.
    w_t = jnp.asarray(w).T
    b2 = jnp.asarray(b).reshape(1, d)

    w_bytes = d * d * jnp.dtype(w_t.dtype).itemsize
    bias_bytes = d * jnp.dtype(b2.dtype).itemsize

    # --- generation-aware VMEM cap (leave headroom for Mosaic scratch) ------
    try:
        phys_vmem = int(pltpu.get_tpu_info().vmem_capacity_bytes)
    except Exception:
        phys_vmem = 64 << 20                  # conservative default (v7x)
    vmem_cap = phys_vmem * 7 // 8             # ~56 MiB on v7x, ~112 MiB v5e/v6e

    # --- batch tiling --------------------------------------------------------
    def footprint(tm):
        # x0 / x / out double-buffered, W + bias single-buffered, plus the
        # in-kernel f32 temporaries (lin / out) for one tile.
        return 3 * 2 * tm * d * itemsize + w_bytes + bias_bytes + 2 * tm * d * 4

    tm = _round_up(min(block_m, _round_up(B, sublane)), sublane)
    while tm > sublane and footprint(tm) > vmem_cap - (4 << 20):
        tm = _round_up(max(sublane, tm // 2), sublane)

    # Guarantee >=2 (ideally >=4) batch tiles so a dual-TensorCore part (v7x)
    # can shard the "parallel" axis -- but only if the resulting tiles stay
    # large enough (>=512 rows) to amortize the ~0.35us per-grid-step cost.
    for target_tiles in (4, 2):
        if pl.cdiv(B, tm) < target_tiles:
            cand = _round_up(pl.cdiv(B, target_tiles), sublane)
            if cand >= 512:
                tm = cand

    grid = (pl.cdiv(B, tm),)

    vmem_limit = int(min(max(footprint(tm) + (4 << 20), 16 << 20), vmem_cap))

    cost = pl.CostEstimate(
        flops=2 * B * d * d + 3 * B * d,
        transcendentals=0,
        bytes_accessed=(3 * B * d + d * d + d) * itemsize,
    )

    def _build_and_call(single_buffer_resident: bool):
        def resident_spec(shape):
            if single_buffer_resident:
                # Constant index_map -> never re-DMA'd; single-buffer to give
                # the second copy of W back to the VMEM budget.
                return pl.BlockSpec(shape, lambda i: (0, 0),
                                    pipeline_mode=pl.Buffered(1))
            return pl.BlockSpec(shape, lambda i: (0, 0))

        return pl.pallas_call(
            cross_layer_kernel,
            out_shape=jax.ShapeDtypeStruct((B, d), x.dtype),
            grid_spec=pl.GridSpec(
                grid=grid,
                in_specs=[
                    pl.BlockSpec((tm, d), lambda i: (i, 0)),   # x0 tile
                    pl.BlockSpec((tm, d), lambda i: (i, 0)),   # x tile
                    resident_spec((d, d)),                     # W.T (resident)
                    resident_spec((1, d)),                     # bias (resident)
                ],
                out_specs=pl.BlockSpec((tm, d), lambda i: (i, 0)),
            ),
            compiler_params=pltpu.CompilerParams(
                dimension_semantics=("parallel",),
                vmem_limit_bytes=vmem_limit,
            ),
            cost_estimate=cost,
        )(x0, x, w_t, b2)

    try:
        return _build_and_call(True)
    except Exception:
        # Compatibility fallback: some JAX builds reject pipeline_mode /
        # Buffered(1) on pallas_call BlockSpecs; retry with default buffering.
        return _build_and_call(False)


if __name__ == "__main__":
    key = jax.random.PRNGKey(0)
    k0, k1, kw, kb = jax.random.split(key, 4)

    # Small shapes consistent with the tabular-DCN module.
    B, d = 8, 32
    x0 = jax.random.normal(k0, (B, d), dtype=jnp.float32)
    x = jax.random.normal(k1, (B, d), dtype=jnp.float32)

    # Deterministic Linear init (mimics PyTorch's U(-1/sqrt(d), 1/sqrt(d)))
    bound = 1.0 / (d ** 0.5)
    w = jax.random.uniform(kw, (d, d), minval=-bound, maxval=bound,
                           dtype=jnp.float32)
    b = jax.random.uniform(kb, (d,), minval=-bound, maxval=bound,
                           dtype=jnp.float32)

    out = jax.block_until_ready(cross_layer(x0, x, w, b))
    ref = x0 * (x @ w.T + b) + x
    assert out.shape == ref.shape, "shape mismatch vs reference"
    assert jnp.allclose(out, ref, atol=1e-5, rtol=1e-5), "mismatch vs reference"

    # Second small check: multi-tile grid with a partial (masked) last tile
    # and a non-multiple-of-128 feature width (no padding anywhere).
    B2, d2 = 200, 48
    k2, k3, kw2, kb2 = jax.random.split(jax.random.PRNGKey(0), 4)
    x0b = jax.random.normal(k2, (B2, d2), dtype=jnp.float32)
    xb = jax.random.normal(k3, (B2, d2), dtype=jnp.float32)
    bound2 = 1.0 / (d2 ** 0.5)
    wb = jax.random.uniform(kw2, (d2, d2), minval=-bound2, maxval=bound2,
                            dtype=jnp.float32)
    bb = jax.random.uniform(kb2, (d2,), minval=-bound2, maxval=bound2,
                            dtype=jnp.float32)
    outb = jax.block_until_ready(cross_layer(x0b, xb, wb, bb, block_m=64))
    refb = x0b * (xb @ wb.T + bb) + xb
    assert outb.shape == refb.shape, "shape mismatch vs reference (case 2)"
    assert jnp.allclose(outb, refb, atol=1e-5, rtol=1e-5), "mismatch (case 2)"

    print("KERNEL_OK")
</pallas_src>

<mosaic_0001>
module attributes {stable_mosaic.version = 11 : i64} {
  func.func @cross_layer_kernel(%arg0: i32, %arg1: memref<8x32xf32, #tpu.memory_space<vmem>>, %arg2: memref<8x32xf32, #tpu.memory_space<vmem>>, %arg3: memref<32x32xf32, #tpu.memory_space<vmem>>, %arg4: memref<1x32xf32, #tpu.memory_space<vmem>>, %arg5: memref<8x32xf32, #tpu.memory_space<vmem>>) attributes {dimension_semantics = [#tpu.dimension_semantics<parallel>], iteration_bounds = array<i64: 1>, scalar_prefetch = 0 : i64, scratch_operands = 0 : i64, tpu.core_type = #tpu.core_type<tc>, window_params = [{transform_indices = @transform_0, window_bounds = array<i64: 8, 32>}, {transform_indices = @transform_1, window_bounds = array<i64: 8, 32>}, {pipeline_mode = #tpu.pipeline_mode<synchronous>, transform_indices = @transform_2, window_bounds = array<i64: 32, 32>}, {pipeline_mode = #tpu.pipeline_mode<synchronous>, transform_indices = @transform_3, window_bounds = array<i64: 1, 32>}, {transform_indices = @transform_4, window_bounds = array<i64: 8, 32>}]} {
    %c0 = arith.constant 0 : index
    %c0_0 = arith.constant 0 : index
    %0 = vector.load %arg2[%c0, %c0_0] : memref<8x32xf32, #tpu.memory_space<vmem>>, vector<8x32xf32>
    %c0_1 = arith.constant 0 : index
    %c0_2 = arith.constant 0 : index
    %1 = vector.load %arg3[%c0_1, %c0_2] : memref<32x32xf32, #tpu.memory_space<vmem>>, vector<32x32xf32>
    %cst = arith.constant dense<0.000000e+00> : vector<8x32xf32>
    %2 = tpu.matmul %0, %1, %cst {dimension_numbers = #tpu.dot_dimension_numbers<[1], [0], [0], [1], [0, 0, 1, 1], [], []>} : vector<8x32xf32>, vector<32x32xf32>, vector<8x32xf32> -> vector<8x32xf32>
    %c0_3 = arith.constant 0 : index
    %c0_4 = arith.constant 0 : index
    %3 = vector.load %arg4[%c0_3, %c0_4] : memref<1x32xf32, #tpu.memory_space<vmem>>, vector<1x32xf32>
    %4 = vector.broadcast %3 : vector<1x32xf32> to vector<8x32xf32>
    %5 = arith.addf %2, %4 : vector<8x32xf32>
    %c0_5 = arith.constant 0 : index
    %c0_6 = arith.constant 0 : index
    %6 = vector.load %arg1[%c0_5, %c0_6] : memref<8x32xf32, #tpu.memory_space<vmem>>, vector<8x32xf32>
    %7 = arith.mulf %6, %5 : vector<8x32xf32>
    %8 = arith.addf %7, %0 : vector<8x32xf32>
    %c0_7 = arith.constant 0 : index
    %c0_8 = arith.constant 0 : index
    %9 = vector.load %arg5[%c0_7, %c0_8] : memref<8x32xf32, #tpu.memory_space<vmem>>, vector<8x32xf32>
    tpu.vector_store %arg5[%c0_7, %c0_8], %8 {strides = array<i32>} : memref<8x32xf32, #tpu.memory_space<vmem>>, vector<8x32xf32>,
    return
  }
  func.func @transform_0(%arg0: i32) -> (i32, i32) {
    %c0_i32 = arith.constant 0 : i32
    %c0_i32_0 = arith.constant 0 : i32
    return %arg0, %c0_i32 : i32, i32
  }
  func.func @transform_1(%arg0: i32) -> (i32, i32) {
    %c0_i32 = arith.constant 0 : i32
    %c0_i32_0 = arith.constant 0 : i32
    return %arg0, %c0_i32 : i32, i32
  }
  func.func @transform_2(%arg0: i32) -> (i32, i32) {
    %c0_i32 = arith.constant 0 : i32
    %c0_i32_0 = arith.constant 0 : i32
    %c0_i32_1 = arith.constant 0 : i32
    return %c0_i32, %c0_i32_0 : i32, i32
  }
  func.func @transform_3(%arg0: i32) -> (i32, i32) {
    %c0_i32 = arith.constant 0 : i32
    %c0_i32_0 = arith.constant 0 : i32
    %c0_i32_1 = arith.constant 0 : i32
    return %c0_i32, %c0_i32_0 : i32, i32
  }
  func.func @transform_4(%arg0: i32) -> (i32, i32) {
    %c0_i32 = arith.constant 0 : i32
    %c0_i32_0 = arith.constant 0 : i32
    return %arg0, %c0_i32 : i32, i32
  }
}

module attributes {stable_mosaic.version = 11 : i64} {
  func.func @cross_layer_kernel(%arg0: i32, %arg1: memref<8x32xf32, #tpu.memory_space<vmem>>, %arg2: memref<8x32xf32, #tpu.memory_space<vmem>>, %arg3: memref<32x32xf32, #tpu.memory_space<vmem>>, %arg4: memref<1x32xf32, #tpu.memory_space<vmem>>, %arg5: memref<8x32xf32, #tpu.memory_space<vmem>>) attributes {dimension_semantics = [#tpu.dimension_semantics<parallel>], iteration_bounds = array<i64: 1>, scalar_prefetch = 0 : i64, scratch_operands = 0 : i64, tpu.core_type = #tpu.core_type<tc>, window_params = [{transform_indices = @transform_0, window_bounds = array<i64: 8, 32>}, {transform_indices = @transform_1, window_bounds = array<i64: 8, 32>}, {pipeline_mode = #tpu.pipeline_mode<synchronous>, transform_indices = @transform_2, window_bounds = array<i64: 32, 32>}, {pipeline_mode = #tpu.pipeline_mode<synchronous>, transform_indices = @transform_3, window_bounds = array<i64: 1, 32>}, {transform_indices = @transform_4, window_bounds = array<i64: 8, 32>}]} {
    %c0 = arith.constant 0 : index
    %c0_0 = arith.constant 0 : index
    %0 = vector.load %arg2[%c0, %c0_0] : memref<8x32xf32, #tpu.memory_space<vmem>>, vector<8x32xf32>
    %c0_1 = arith.constant 0 : index
    %c0_2 = arith.constant 0 : index
    %1 = vector.load %arg3[%c0_1, %c0_2] : memref<32x32xf32, #tpu.memory_space<vmem>>, vector<32x32xf32>
    %cst = arith.constant dense<0.000000e+00> : vector<8x32xf32>
    %2 = tpu.matmul %0, %1, %cst {dimension_numbers = #tpu.dot_dimension_numbers<[1], [0], [0], [1], [0, 0, 1, 1], [], []>} : vector<8x32xf32>, vector<32x32xf32>, vector<8x32xf32> -> vector<8x32xf32>
    %c0_3 = arith.constant 0 : index
    %c0_4 = arith.constant 0 : index
    %3 = vector.load %arg4[%c0_3, %c0_4] : memref<1x32xf32, #tpu.memory_space<vmem>>, vector<1x32xf32>
    %4 = vector.broadcast %3 : vector<1x32xf32> to vector<8x32xf32>
    %5 = arith.addf %2, %4 : vector<8x32xf32>
    %c0_5 = arith.constant 0 : index
    %c0_6 = arith.constant 0 : index
    %6 = vector.load %arg1[%c0_5, %c0_6] : memref<8x32xf32, #tpu.memory_space<vmem>>, vector<8x32xf32>
    %7 = arith.mulf %6, %5 : vector<8x32xf32>
    %8 = arith.addf %7, %0 : vector<8x32xf32>
    %c0_7 = arith.constant 0 : index
    %c0_8 = arith.constant 0 : index
    %9 = vector.load %arg5[%c0_7, %c0_8] : memref<8x32xf32, #tpu.memory_space<vmem>>, vector<8x32xf32>
    tpu.vector_store %arg5[%c0_7, %c0_8], %8 {strides = array<i32>} : memref<8x32xf32, #tpu.memory_space<vmem>>, vector<8x32xf32>,
    return
  }
  func.func @transform_0(%arg0: i32) -> (i32, i32) {
    %c0_i32 = arith.constant 0 : i32
    %c0_i32_0 = arith.constant 0 : i32
    return %arg0, %c0_i32 : i32, i32
  }
  func.func @transform_1(%arg0: i32) -> (i32, i32) {
    %c0_i32 = arith.constant 0 : i32
    %c0_i32_0 = arith.constant 0 : i32
    return %arg0, %c0_i32 : i32, i32
  }
  func.func @transform_2(%arg0: i32) -> (i32, i32) {
    %c0_i32 = arith.constant 0 : i32
    %c0_i32_0 = arith.constant 0 : i32
    %c0_i32_1 = arith.constant 0 : i32
    return %c0_i32, %c0_i32_0 : i32, i32
  }
  func.func @transform_3(%arg0: i32) -> (i32, i32) {
    %c0_i32 = arith.constant 0 : i32
    %c0_i32_0 = arith.constant 0 : i32
    %c0_i32_1 = arith.constant 0 : i32
    return %c0_i32, %c0_i32_0 : i32, i32
  }
  func.func @transform_4(%arg0: i32) -> (i32, i32) {
    %c0_i32 = arith.constant 0 : i32
    %c0_i32_0 = arith.constant 0 : i32
    return %arg0, %c0_i32 : i32, i32
  }
}

</mosaic_0001>

<llo_original>
// kernel: tpu_custom_call.1
$region0: #{tpu_custom_call.1}
  #allocation0 [shape = 'u32[]', space=smem, size = 0x4, offset = 0x4, fixed_abs, tag = 'smem constant byte address 0x4 - core index']
  #allocation1 [shape = 'u32[144,128]{1,0:T(1,128)}', space=vmem, size = 0x12000, scoped, tag = 'internal scratch']
  %s0 = inlined_call_operand.hbm [shape: f32[8,32], index: 0, kind: input, shape index: {}]
  %s1 = inlined_call_operand.hbm [shape: f32[8,32], index: 1, kind: input, shape index: {}]
  %s2 = inlined_call_operand.hbm [shape: f32[32,32], index: 2, kind: input, shape index: {}]
  %s3 = inlined_call_operand.vmem [shape: f32[1,32], index: 3, kind: input, shape index: {}]
  %s4 = inlined_call_operand.hbm [shape: f32[8,32], index: 4, kind: output, shape index: {}]
  %s5 = sld [smem:[#allocation0]]
  $region38: #{tpu_custom_call.1} parent=0
    _
  %s7 = ssub.s32 1, %s5
  %s8 = scalar_select 0, %s7, %s5
  $region1: #{tpu_custom_call.1} parent=0
    #allocation2 [shape = 'u8[4096]{0}', space=vmem, size = 0x1000, scoped, tag = 'input window, operand 0, single buffered']
    #allocation3 [shape = 's32[1]{0}', space=sflag, size = 0x4, scoped, tag = 'scoped memory for tpu_custom_call.1']
    #allocation4 [shape = 's32[1]{0}', space=sflag, size = 0x4, scoped, tag = 'scoped memory for tpu_custom_call.1']
    #allocation5 [shape = 'u8[4096]{0}', space=vmem, size = 0x1000, scoped, tag = 'input window, operand 1, single buffered']
    #allocation6 [shape = 's32[1]{0}', space=sflag, size = 0x4, scoped, tag = 'scoped memory for tpu_custom_call.1']
    #allocation7 [shape = 'u8[16384]{0}', space=vmem, size = 0x4000, scoped, tag = 'input window, operand 2, single buffered']
    #allocation8 [shape = 'u8[4096]{0}', space=vmem, size = 0x1000, scoped, tag = 'output window, operand 0, single buffered']
    %9 = vsyncpa [#allocation3], 0
    %10 = vsyncpa [#allocation6], 0
    %11 = vsyncpa [#allocation4], 0
    // Predicated region
    $region2: #{tpu_custom_call.1} parent=1 // pred_check
      _
    $region3: #{tpu_custom_call.1} parent=1 // pred_check_branch
      %13 = sbr.rel (0) target = $region5
    $region4: #{tpu_custom_call.1} parent=1 // pred_region
      %s15 = ssub.s32 128, 128
      %16 = vsyncadd [#allocation3], %s15
      %s18 = sshll.u32 [#allocation2], 4
      %s19 = int_to_ptr.vmem [resolvable:$true] %s18
      %21 = dma.hbm_to_vmem [thread:$0]  %s0, 128, %s19, [#allocation3]
    $region5: #{tpu_custom_call.1} parent=1 // pred_fallthru
      _
    // Predicated region
    $region6: #{tpu_custom_call.1} parent=1 // pred_check
      _
    $region7: #{tpu_custom_call.1} parent=1 // pred_check_branch
      %23 = sbr.rel (0) target = $region9
    $region8: #{tpu_custom_call.1} parent=1 // pred_region
      %s25 = ssub.s32 128, 128
      %26 = vsyncadd [#allocation6], %s25
      %s28 = sshll.u32 [#allocation5], 4
      %s29 = int_to_ptr.vmem [resolvable:$true] %s28
      %31 = dma.hbm_to_vmem [thread:$0]  %s1, 128, %s29, [#allocation6]
    $region9: #{tpu_custom_call.1} parent=1 // pred_fallthru
      _
    // Predicated region
    $region10: #{tpu_custom_call.1} parent=1 // pred_check
      _
    $region11: #{tpu_custom_call.1} parent=1 // pred_check_branch
      %33 = sbr.rel (0) target = $region13
    $region12: #{tpu_custom_call.1} parent=1 // pred_region
      %s35 = ssub.s32 512, 512
      %36 = vsyncadd [#allocation6], %s35
      %s37 = sshll.u32 [#allocation7], 4
      %s38 = int_to_ptr.vmem [resolvable:$true] %s37
      %43 = dma.hbm_to_vmem [thread:$0]  %s2, 512, %s38, [#allocation6], 128, 128, 8
    $region13: #{tpu_custom_call.1} parent=1 // pred_fallthru
      _
    // Predicated region
    $region14: #{tpu_custom_call.1} parent=1 // pred_check
      _
    $region15: #{tpu_custom_call.1} parent=1 // pred_check_branch
      %45 = sbr.rel (0) target = $region17
    $region16: #{tpu_custom_call.1} parent=1 // pred_region
      _
    $region17: #{tpu_custom_call.1} parent=1 // pred_fallthru
      _
    // Predicated region
    $region18: #{tpu_custom_call.1} parent=1 // pred_check
      _
    $region19: #{tpu_custom_call.1} parent=1 // pred_check_branch
      %47 = sbr.rel (0) target = $region21
    $region20: #{tpu_custom_call.1} parent=1 // pred_region
      %48 = dma.done [#allocation3], 128
    $region21: #{tpu_custom_call.1} parent=1 // pred_fallthru
      _
    // Predicated region
    $region22: #{tpu_custom_call.1} parent=1 // pred_check
      _
    $region23: #{tpu_custom_call.1} parent=1 // pred_check_branch
      %50 = sbr.rel (0) target = $region25
    $region24: #{tpu_custom_call.1} parent=1 // pred_region
      %51 = dma.done [#allocation6], 128
    $region25: #{tpu_custom_call.1} parent=1 // pred_fallthru
      _
    // Predicated region
    $region26: #{tpu_custom_call.1} parent=1 // pred_check
      _
    $region27: #{tpu_custom_call.1} parent=1 // pred_check_branch
      %53 = sbr.rel (0) target = $region29
    $region28: #{tpu_custom_call.1} parent=1 // pred_region
      %54 = dma.done [#allocation6], 512
    $region29: #{tpu_custom_call.1} parent=1 // pred_fallthru
      _
    %v55 = vld [vmem:[#allocation5] sm:$0xff]
    %v56 = vld [vmem:[#allocation7] sm:$0xff]
    %v57 = vld [vmem:[#allocation7 + $0x8] sm:$0xff]
    %v58 = vld [vmem:[#allocation7 + $0x10] sm:$0xff]
    %v59 = vld [vmem:[#allocation7 + $0x18] sm:$0xff]
    %v60 = vld [vmem:[%s3] sm:$0x1]
    %v62 = vlaneseq
    %v63 = vshrl.u32 %v62, 7
    %v64 = vsub.s32 0, %v63
    %v65 = vrot.slane %v60, %v64
    %vm67 = vcmask 261120
    %v69 = vsel %vm67, %v55, 0
    %71 = vmatprep.subr.mxu0 0.0
    %72 = vmatpush1.msra.mxu0 %v56
    %73 = vmatprep.subr.mxu0 0.0
    %74 = vmatpush1.msra.mxu0 %v57
    %75 = vmatprep.subr.mxu0 0.0
    %76 = vmatpush1.msra.mxu0 %v58
    %77 = vmatprep.subr.mxu0 0.0
    %78 = vmatpush1.msra.mxu0 %v59
    %79 = vmatprep.subr.mxu0 0.0
    %80 = vmatpush1.msra.mxu0 0.0
    %81 = vmatprep.subr.mxu0 0.0
    %82 = vmatpush1.msra.mxu0 0.0
    %83 = vmatprep.subr.mxu0 0.0
    %84 = vmatpush1.msra.mxu0 0.0
    %85 = vmatprep.subr.mxu0 0.0
    %86 = vmatpush1.msra.mxu0 0.0
    %87 = vmatprep.subr.mxu0 0.0
    %88 = vmatpush1.msra.mxu0 0.0
    %89 = vmatprep.subr.mxu0 0.0
    %90 = vmatpush1.msra.mxu0 0.0
    %91 = vmatprep.subr.mxu0 0.0
    %92 = vmatpush1.msra.mxu0 0.0
    %93 = vmatprep.subr.mxu0 0.0
    %94 = vmatpush1.msra.mxu0 0.0
    %95 = vmatprep.subr.mxu0 0.0
    %96 = vmatpush1.msra.mxu0 0.0
    %97 = vmatprep.subr.mxu0 0.0
    %98 = vmatpush1.msra.mxu0 0.0
    %99 = vmatprep.subr.mxu0 0.0
    %100 = vmatpush1.msra.mxu0 0.0
    %101 = vmatprep.subr.mxu0 0.0
    %102 = vmatpush1.msra.mxu0 0.0
    %103 = vmatprep.subr.mxu0 0.0
    %104 = vmatpush1.msra.mxu0 0.0
    %105 = vmatprep.subr.mxu0 0.0
    %106 = vmatpush1.msra.mxu0 0.0
    %107 = vmatprep.subr.mxu0 0.0
    %108 = vmatpush1.msra.mxu0 0.0
    %109 = vmatprep.subr.mxu0 0.0
    %110 = vmatpush1.msra.mxu0 0.0
    %111 = vmatprep.subr.mxu0 0.0
    %112 = vmatpush1.msra.mxu0 0.0
    %113 = vmatprep.subr.mxu0 0.0
    %114 = vmatpush1.msra.mxu0 0.0
    %115 = vmatprep.subr.mxu0 0.0
    %116 = vmatpush1.msra.mxu0 0.0
    %117 = vmatprep.subr.mxu0 0.0
    %118 = vmatpush1.msra.mxu0 0.0
    %119 = vmatprep.subr.mxu0 0.0
    %120 = vmatpush1.msra.mxu0 0.0
    %121 = vmatprep.subr.mxu0 0.0
    %122 = vmatpush1.msra.mxu0 0.0
    %123 = vmatprep.subr.mxu0 0.0
    %124 = vmatpush1.msra.mxu0 0.0
    %125 = vmatprep.subr.mxu0 0.0
    %126 = vmatpush1.msra.mxu0 0.0
    %127 = vmatprep.subr.mxu0 0.0
    %128 = vmatpush1.msra.mxu0 0.0
    %129 = vmatprep.subr.mxu0 0.0
    %130 = vmatpush1.msra.mxu0 0.0
    %131 = vmatprep.subr.mxu0 0.0
    %132 = vmatpush1.msra.mxu0 0.0
    %133 = vmatprep.subr.mxu0 0.0
    %134 = vmatpush1.msra.mxu0 0.0
    %135 = vmatprep.mubr.f32.mxu0 0.0
    %136 = vmatmul.mubr.f32.gmra.mrb[0].mxu0 %v69
    %v137 = vpop.f32.mrb[0].mxu0
    %v138 = vadd.f32 %v65, %v137
    %v139 = vpop.f32.mrb[0].mxu0
    %140 = vdwg.mxu0
    %v141 = vld [vmem:[#allocation2] sm:$0xff]
    %v142 = vmul.f32 %v141, %v138
    %v143 = vadd.f32 %v142, %v55
    %144 = vst.msk [vmem:[#allocation8] sm:$0xff] %vm67, %v143
    // Predicated region
    $region30: #{tpu_custom_call.1} parent=1 // pred_check
      _
    $region31: #{tpu_custom_call.1} parent=1 // pred_check_branch
      %146 = sbr.rel (0) target = $region33
    $region32: #{tpu_custom_call.1} parent=1 // pred_region
      %s148 = ssub.s32 128, 128
      %149 = vsyncadd [#allocation4], %s148
      %s151 = sshll.u32 [#allocation8], 4
      %s152 = int_to_ptr.vmem [resolvable:$true] %s151
      %154 = dma.vmem_to_hbm [thread:$0]  %s152, 128, %s4, [#allocation4]
    $region33: #{tpu_custom_call.1} parent=1 // pred_fallthru
      _
    // Predicated region
    $region34: #{tpu_custom_call.1} parent=1 // pred_check
      _
    $region35: #{tpu_custom_call.1} parent=1 // pred_check_branch
      %156 = sbr.rel (0) target = $region37
    $region36: #{tpu_custom_call.1} parent=1 // pred_region
      %157 = dma.done [#allocation4], 128
    $region37: #{tpu_custom_call.1} parent=1 // pred_fallthru
      _
    %158 = vsyncpa [#allocation3], 1
    %159 = vsyncpa [#allocation6], 1
    %160 = vsyncpa [#allocation4], 1

// kernel: tpu_custom_call.1
$region0: #{tpu_custom_call.1}
  #allocation0 [shape = 'u32[]', space=smem, size = 0x4, offset = 0x4, fixed_abs, tag = 'smem constant byte address 0x4 - core index']
  #allocation1 [shape = 'u32[144,128]{1,0:T(1,128)}', space=vmem, size = 0x12000, scoped, tag = 'internal scratch']
  %s0 = inlined_call_operand.hbm [shape: f32[8,32], index: 0, kind: input, shape index: {}]
  %s1 = inlined_call_operand.hbm [shape: f32[8,32], index: 1, kind: input, shape index: {}]
  %s2 = inlined_call_operand.hbm [shape: f32[32,32], index: 2, kind: input, shape index: {}]
  %s3 = inlined_call_operand.vmem [shape: f32[1,32], index: 3, kind: input, shape index: {}]
  %s4 = inlined_call_operand.hbm [shape: f32[8,32], index: 4, kind: output, shape index: {}]
  %s5 = sld [smem:[#allocation0]]
  $region38: #{tpu_custom_call.1} parent=0
    _
  %s7 = ssub.s32 1, %s5
  %s8 = scalar_select 0, %s7, %s5
  $region1: #{tpu_custom_call.1} parent=0
    #allocation2 [shape = 'u8[4096]{0}', space=vmem, size = 0x1000, scoped, tag = 'input window, operand 0, single buffered']
    #allocation3 [shape = 's32[1]{0}', space=sflag, size = 0x4, scoped, tag = 'scoped memory for tpu_custom_call.1']
    #allocation4 [shape = 's32[1]{0}', space=sflag, size = 0x4, scoped, tag = 'scoped memory for tpu_custom_call.1']
    #allocation5 [shape = 'u8[4096]{0}', space=vmem, size = 0x1000, scoped, tag = 'input window, operand 1, single buffered']
    #allocation6 [shape = 's32[1]{0}', space=sflag, size = 0x4, scoped, tag = 'scoped memory for tpu_custom_call.1']
    #allocation7 [shape = 'u8[16384]{0}', space=vmem, size = 0x4000, scoped, tag = 'input window, operand 2, single buffered']
    #allocation8 [shape = 'u8[4096]{0}', space=vmem, size = 0x1000, scoped, tag = 'output window, operand 0, single buffered']
    %9 = vsyncpa [#allocation3], 0
    %10 = vsyncpa [#allocation6], 0
    %11 = vsyncpa [#allocation4], 0
    // Predicated region
    $region2: #{tpu_custom_call.1} parent=1 // pred_check
      _
    $region3: #{tpu_custom_call.1} parent=1 // pred_check_branch
      %13 = sbr.rel (0) target = $region5
    $region4: #{tpu_custom_call.1} parent=1 // pred_region
      %s15 = ssub.s32 128, 128
      %16 = vsyncadd [#allocation3], %s15
      %s18 = sshll.u32 [#allocation2], 4
      %s19 = int_to_ptr.vmem [resolvable:$true] %s18
      %21 = dma.hbm_to_vmem [thread:$0]  %s0, 128, %s19, [#allocation3]
    $region5: #{tpu_custom_call.1} parent=1 // pred_fallthru
      _
    // Predicated region
    $region6: #{tpu_custom_call.1} parent=1 // pred_check
      _
    $region7: #{tpu_custom_call.1} parent=1 // pred_check_branch
      %23 = sbr.rel (0) target = $region9
    $region8: #{tpu_custom_call.1} parent=1 // pred_region
      %s25 = ssub.s32 128, 128
      %26 = vsyncadd [#allocation6], %s25
      %s28 = sshll.u32 [#allocation5], 4
      %s29 = int_to_ptr.vmem [resolvable:$true] %s28
      %31 = dma.hbm_to_vmem [thread:$0]  %s1, 128, %s29, [#allocation6]
    $region9: #{tpu_custom_call.1} parent=1 // pred_fallthru
      _
    // Predicated region
    $region10: #{tpu_custom_call.1} parent=1 // pred_check
      _
    $region11: #{tpu_custom_call.1} parent=1 // pred_check_branch
      %33 = sbr.rel (0) target = $region13
    $region12: #{tpu_custom_call.1} parent=1 // pred_region
      %s35 = ssub.s32 512, 512
      %36 = vsyncadd [#allocation6], %s35
      %s37 = sshll.u32 [#allocation7], 4
      %s38 = int_to_ptr.vmem [resolvable:$true] %s37
      %43 = dma.hbm_to_vmem [thread:$0]  %s2, 512, %s38, [#allocation6], 128, 128, 8
    $region13: #{tpu_custom_call.1} parent=1 // pred_fallthru
      _
    // Predicated region
    $region14: #{tpu_custom_call.1} parent=1 // pred_check
      _
    $region15: #{tpu_custom_call.1} parent=1 // pred_check_branch
      %45 = sbr.rel (0) target = $region17
    $region16: #{tpu_custom_call.1} parent=1 // pred_region
      _
    $region17: #{tpu_custom_call.1} parent=1 // pred_fallthru
      _
    // Predicated region
    $region18: #{tpu_custom_call.1} parent=1 // pred_check
      _
    $region19: #{tpu_custom_call.1} parent=1 // pred_check_branch
      %47 = sbr.rel (0) target = $region21
    $region20: #{tpu_custom_call.1} parent=1 // pred_region
      %48 = dma.done [#allocation3], 128
    $region21: #{tpu_custom_call.1} parent=1 // pred_fallthru
      _
    // Predicated region
    $region22: #{tpu_custom_call.1} parent=1 // pred_check
      _
    $region23: #{tpu_custom_call.1} parent=1 // pred_check_branch
      %50 = sbr.rel (0) target = $region25
    $region24: #{tpu_custom_call.1} parent=1 // pred_region
      %51 = dma.done [#allocation6], 128
    $region25: #{tpu_custom_call.1} parent=1 // pred_fallthru
      _
    // Predicated region
    $region26: #{tpu_custom_call.1} parent=1 // pred_check
      _
    $region27: #{tpu_custom_call.1} parent=1 // pred_check_branch
      %53 = sbr.rel (0) target = $region29
    $region28: #{tpu_custom_call.1} parent=1 // pred_region
      %54 = dma.done [#allocation6], 512
    $region29: #{tpu_custom_call.1} parent=1 // pred_fallthru
      _
    %v55 = vld [vmem:[#allocation5] sm:$0xff]
    %v56 = vld [vmem:[#allocation7] sm:$0xff]
    %v57 = vld [vmem:[#allocation7 + $0x8] sm:$0xff]
    %v58 = vld [vmem:[#allocation7 + $0x10] sm:$0xff]
    %v59 = vld [vmem:[#allocation7 + $0x18] sm:$0xff]
    %v60 = vld [vmem:[%s3] sm:$0x1]
    %v62 = vlaneseq
    %v63 = vshrl.u32 %v62, 7
    %v64 = vsub.s32 0, %v63
    %v65 = vrot.slane %v60, %v64
    %vm67 = vcmask 261120
    %v69 = vsel %vm67, %v55, 0
    %71 = vmatprep.subr.mxu0 0.0
    %72 = vmatpush1.msra.mxu0 %v56
    %73 = vmatprep.subr.mxu0 0.0
    %74 = vmatpush1.msra.mxu0 %v57
    %75 = vmatprep.subr.mxu0 0.0
    %76 = vmatpush1.msra.mxu0 %v58
    %77 = vmatprep.subr.mxu0 0.0
    %78 = vmatpush1.msra.mxu0 %v59
    %79 = vmatprep.subr.mxu0 0.0
    %80 = vmatpush1.msra.mxu0 0.0
    %81 = vmatprep.subr.mxu0 0.0
    %82 = vmatpush1.msra.mxu0 0.0
    %83 = vmatprep.subr.mxu0 0.0
    %84 = vmatpush1.msra.mxu0 0.0
    %85 = vmatprep.subr.mxu0 0.0
    %86 = vmatpush1.msra.mxu0 0.0
    %87 = vmatprep.subr.mxu0 0.0
    %88 = vmatpush1.msra.mxu0 0.0
    %89 = vmatprep.subr.mxu0 0.0
    %90 = vmatpush1.msra.mxu0 0.0
    %91 = vmatprep.subr.mxu0 0.0
    %92 = vmatpush1.msra.mxu0 0.0
    %93 = vmatprep.subr.mxu0 0.0
    %94 = vmatpush1.msra.mxu0 0.0
    %95 = vmatprep.subr.mxu0 0.0
    %96 = vmatpush1.msra.mxu0 0.0
    %97 = vmatprep.subr.mxu0 0.0
    %98 = vmatpush1.msra.mxu0 0.0
    %99 = vmatprep.subr.mxu0 0.0
    %100 = vmatpush1.msra.mxu0 0.0
    %101 = vmatprep.subr.mxu0 0.0
    %102 = vmatpush1.msra.mxu0 0.0
    %103 = vmatprep.subr.mxu0 0.0
    %104 = vmatpush1.msra.mxu0 0.0
    %105 = vmatprep.subr.mxu0 0.0
    %106 = vmatpush1.msra.mxu0 0.0
    %107 = vmatprep.subr.mxu0 0.0
    %108 = vmatpush1.msra.mxu0 0.0
    %109 = vmatprep.subr.mxu0 0.0
    %110 = vmatpush1.msra.mxu0 0.0
    %111 = vmatprep.subr.mxu0 0.0
    %112 = vmatpush1.msra.mxu0 0.0
    %113 = vmatprep.subr.mxu0 0.0
    %114 = vmatpush1.msra.mxu0 0.0
    %115 = vmatprep.subr.mxu0 0.0
    %116 = vmatpush1.msra.mxu0 0.0
    %117 = vmatprep.subr.mxu0 0.0
    %118 = vmatpush1.msra.mxu0 0.0
    %119 = vmatprep.subr.mxu0 0.0
    %120 = vmatpush1.msra.mxu0 0.0
    %121 = vmatprep.subr.mxu0 0.0
    %122 = vmatpush1.msra.mxu0 0.0
    %123 = vmatprep.subr.mxu0 0.0
    %124 = vmatpush1.msra.mxu0 0.0
    %125 = vmatprep.subr.mxu0 0.0
    %126 = vmatpush1.msra.mxu0 0.0
    %127 = vmatprep.subr.mxu0 0.0
    %128 = vmatpush1.msra.mxu0 0.0
    %129 = vmatprep.subr.mxu0 0.0
    %130 = vmatpush1.msra.mxu0 0.0
    %131 = vmatprep.subr.mxu0 0.0
    %132 = vmatpush1.msra.mxu0 0.0
    %133 = vmatprep.subr.mxu0 0.0
    %134 = vmatpush1.msra.mxu0 0.0
    %135 = vmatprep.mubr.f32.mxu0 0.0
    %136 = vmatmul.mubr.f32.gmra.mrb[0].mxu0 %v69
    %v137 = vpop.f32.mrb[0].mxu0
    %v138 = vadd.f32 %v65, %v137
    %v139 = vpop.f32.mrb[0].mxu0
    %140 = vdwg.mxu0
    %v141 = vld [vmem:[#allocation2] sm:$0xff]
    %v142 = vmul.f32 %v141, %v138
    %v143 = vadd.f32 %v142, %v55
    %144 = vst.msk [vmem:[#allocation8] sm:$0xff] %vm67, %v143
    // Predicated region
    $region30: #{tpu_custom_call.1} parent=1 // pred_check
      _
    $region31: #{tpu_custom_call.1} parent=1 // pred_check_branch
      %146 = sbr.rel (0) target = $region33
    $region32: #{tpu_custom_call.1} parent=1 // pred_region
      %s148 = ssub.s32 128, 128
      %149 = vsyncadd [#allocation4], %s148
      %s151 = sshll.u32 [#allocation8], 4
      %s152 = int_to_ptr.vmem [resolvable:$true] %s151
      %154 = dma.vmem_to_hbm [thread:$0]  %s152, 128, %s4, [#allocation4]
    $region33: #{tpu_custom_call.1} parent=1 // pred_fallthru
      _
    // Predicated region
    $region34: #{tpu_custom_call.1} parent=1 // pred_check
      _
    $region35: #{tpu_custom_call.1} parent=1 // pred_check_branch
      %156 = sbr.rel (0) target = $region37
    $region36: #{tpu_custom_call.1} parent=1 // pred_region
      %157 = dma.done [#allocation4], 128
    $region37: #{tpu_custom_call.1} parent=1 // pred_fallthru
      _
    %158 = vsyncpa [#allocation3], 1
    %159 = vsyncpa [#allocation6], 1
    %160 = vsyncpa [#allocation4], 1

</llo_original>
